<compile_context>
chip_gen: v5e
topology: v5e:2x2
jax: 0.10.0
libtpu: 0.0.40
codegen_flags: <defaults>
</compile_context>

<pallas_src>
import functools

import jax
import jax.numpy as jnp
from jax.experimental import pallas as pl
from jax.experimental.pallas import tpu as pltpu


def _layernorm_kernel(x_ref, w_ref, b_ref, o_ref, *, eps):
    # x_ref: (KB, TN, T) block; w_ref / b_ref: (1, TN, 1), already float32.
    x = x_ref[...].astype(jnp.float32)
    mean = jnp.mean(x, axis=-1, keepdims=True)              # (KB, TN, 1)
    xc = x - mean
    var = jnp.mean(xc * xc, axis=-1, keepdims=True)         # biased (.pow(2).mean(2))
    inv_std = jax.lax.rsqrt(var + eps)                      # EUP rsqrt, no divide
    scale = inv_std * w_ref[...]                            # fold weight into scale
    o_ref[...] = (xc * scale + b_ref[...]).astype(o_ref.dtype)
    # TODO(synk): if a v7x bundle dump shows the XLU slot saturated by the two
    # row reductions, offload them to the idle MXU (jnp.dot against a ones
    # column, preferred_element_type=f32); neutral elsewhere, so not default.


def _generation_params():
    """Return (block_byte_target, vmem_limit_bytes) per TPU generation."""
    try:
        kind = jax.devices()[0].device_kind.lower()
    except Exception:  # pragma: no cover - defensive default
        kind = ""
    if "v6" in kind:                                   # v6e: 128 MiB VMEM, ~1.4 TB/s HBM
        return 8 << 20, 64 << 20
    if "v5 lite" in kind or "v5e" in kind or "v5lite" in kind:
        return 4 << 20, 48 << 20                       # v5e: 128 MiB VMEM, ~0.8 TB/s HBM
    if "7" in kind:                                    # v7x: 64 MiB VMEM, ~3.2 TB/s HBM
        return 4 << 20, 32 << 20
    return 4 << 20, 32 << 20                           # conservative default


def _choose_block(K, N, T, target_elems, hard_elems):
    """Pick (KB, TN); prefer contiguous full-(N, T) slabs per batch row."""
    slab = N * T
    if N <= 8 or slab <= min(2 * target_elems, hard_elems):
        # Full feature axis: fully contiguous HBM DMAs (peak DMA efficiency).
        tn = N
        kb = int(min(K, max(1, target_elems // max(1, slab))))
    else:
        # Tile the feature axis (8-aligned for the sublane rule), one row of
        # the batch per block.
        rows = (max(1, target_elems // T) // 8) * 8
        tn = int(min(N, max(8, rows)))
        kb = 1
    # Keep the double-buffer pipeline (and v7x's two TensorCores) fed: aim
    # for >= 4 grid steps whenever the problem is large enough to allow it.
    while kb > 1 and pl.cdiv(K, kb) * pl.cdiv(N, tn) < 4:
        kb = max(1, kb // 2)
    return kb, tn


def layer_norm(x, weight, bias, eps=1e-6, block_bytes=None, require_lane_dense=True):
    """x: (K, N, T); weight, bias: (N,). Returns (K, N, T) in x.dtype."""
    K, N, T = x.shape
    if require_lane_dense and T % 128 != 0:
        raise ValueError(
            f"T={T} is not a multiple of 128: every row store becomes a masked "
            "vst.msk partial store and lane utilization drops to T/128. Fix the "
            "data layout, or pass require_lane_dense=False to accept the slow "
            "path.")

    itemsize = x.dtype.itemsize
    block_cap_bytes, vmem_limit = _generation_params()
    if block_bytes is not None:
        block_cap_bytes = int(block_bytes)

    # Live VMEM per block element at one grid step:
    #   2x input + 2x output double-buffers in x.dtype  +  ~3 f32 temporaries
    #   (x.astype(f32), xc, the scaled result) inside the kernel body.
    live_bytes_per_elem = 4 * itemsize + 3 * 4
    hard_elems = max(8 * T, int(0.75 * vmem_limit) // live_bytes_per_elem)
    target_elems = max(1, min(hard_elems, block_cap_bytes // itemsize))

    kb, tn = _choose_block(K, N, T, target_elems, hard_elems)

    # Grid: feature axis outermost, batch axis innermost -> the tiny (1,tn,1)
    # weight/bias blocks keep the same block index across the inner loop and
    # their DMAs are skipped.  Both axes are fully independent (parallel).
    grid = (pl.cdiv(N, tn), pl.cdiv(K, kb))

    w3 = weight.astype(jnp.float32).reshape(1, N, 1)
    b3 = bias.astype(jnp.float32).reshape(1, N, 1)

    kernel = functools.partial(_layernorm_kernel, eps=float(eps))

    return pl.pallas_call(
        kernel,
        out_shape=jax.ShapeDtypeStruct((K, N, T), x.dtype),
        grid_spec=pltpu.PrefetchScalarGridSpec(
            num_scalar_prefetch=0,
            grid=grid,
            in_specs=[
                pl.BlockSpec((kb, tn, T), lambda j, i: (i, j, 0)),
                pl.BlockSpec((1, tn, 1), lambda j, i: (0, j, 0)),
                pl.BlockSpec((1, tn, 1), lambda j, i: (0, j, 0)),
            ],
            out_specs=pl.BlockSpec((kb, tn, T), lambda j, i: (i, j, 0)),
        ),
        compiler_params=pltpu.CompilerParams(
            # TODO(synk): on v7x, try pltpu.CORE_PARALLEL on the larger grid
            # axis to force sharding across the 2 TensorCores.
            dimension_semantics=("parallel", "parallel"),
            vmem_limit_bytes=int(vmem_limit),
        ),
    )(x, w3, b3)
    # TODO(synk): for extremely long T (a single (8, T) row-slab of several
    # MiB) the reduction should be T-tiled with partial sums.


def layer_norm_ref(x, weight, bias, eps=1e-6):
    x = x.astype(jnp.float32)
    mean = jnp.mean(x, axis=2, keepdims=True)
    xc = x - mean
    std = jnp.sqrt(jnp.mean(xc * xc, axis=2, keepdims=True) + eps)
    out = xc / std
    return (out * weight.astype(jnp.float32).reshape(1, -1, 1)
            + bias.astype(jnp.float32).reshape(1, -1, 1))


if __name__ == "__main__":
    key = jax.random.PRNGKey(0)
    k0, k1, k2, k3, k4 = jax.random.split(key, 5)

    # Case 1: module defaults (reset_parameters: weight=1, bias=0) at small
    # (K, N, T) with a lane-dense T.
    K, N, T = 2, 4, 128
    x = jax.random.normal(k0, (K, N, T), dtype=jnp.float32)
    w = jnp.ones((N,), dtype=jnp.float32)
    b = jnp.zeros((N,), dtype=jnp.float32)
    out = jax.block_until_ready(layer_norm(x, w, b, eps=1e-6))
    ref = layer_norm_ref(x, w, b, eps=1e-6)
    assert out.shape == (K, N, T)
    assert jnp.allclose(out, ref, atol=1e-5, rtol=1e-5), "case 1 mismatch"

    # Case 2: non-trivial affine + tiny block_bytes override to exercise the
    # feature-tiled path (TN < N, ragged feature edge, multi-step grid).
    K2, N2, T2 = 3, 20, 256
    x2 = jax.random.normal(k1, (K2, N2, T2), dtype=jnp.float32)
    w2 = jax.random.normal(k2, (N2,), dtype=jnp.float32)
    b2 = jax.random.normal(k3, (N2,), dtype=jnp.float32)
    out2 = jax.block_until_ready(layer_norm(x2, w2, b2, eps=1e-6, block_bytes=8192))
    ref2 = layer_norm_ref(x2, w2, b2, eps=1e-6)
    assert jnp.allclose(out2, ref2, atol=1e-5, rtol=1e-5), "case 2 mismatch"

    # Case 3: bf16 input (f32 statistics in-kernel, bf16 store) to cover the
    # sub-32-bit footprint accounting and the batch-packed / grid-step path.
    K3, N3, T3 = 4, 16, 128
    x3 = jax.random.normal(k4, (K3, N3, T3), dtype=jnp.float32).astype(jnp.bfloat16)
    w3 = jnp.ones((N3,), dtype=jnp.float32)
    b3 = jnp.zeros((N3,), dtype=jnp.float32)
    out3 = jax.block_until_ready(layer_norm(x3, w3, b3, eps=1e-6))
    ref3 = layer_norm_ref(x3.astype(jnp.float32), w3, b3, eps=1e-6)
    assert out3.dtype == jnp.bfloat16
    assert jnp.allclose(out3.astype(jnp.float32), ref3, atol=5e-2, rtol=5e-2), \
        "case 3 mismatch"

    print("KERNEL_OK")
</pallas_src>

<mosaic_0001>
module attributes {stable_mosaic.version = 11 : i64} {
  func.func @_layernorm_kernel(%arg0: i32, %arg1: i32, %arg2: memref<1x4x128xf32, #tpu.memory_space<vmem>>, %arg3: memref<1x4x1xf32, #tpu.memory_space<vmem>>, %arg4: memref<1x4x1xf32, #tpu.memory_space<vmem>>, %arg5: memref<1x4x128xf32, #tpu.memory_space<vmem>>) attributes {dimension_semantics = [#tpu.dimension_semantics<parallel>, #tpu.dimension_semantics<parallel>], iteration_bounds = array<i64: 1, 2>, scalar_prefetch = 0 : i64, scratch_operands = 0 : i64, tpu.core_type = #tpu.core_type<tc>, window_params = [{transform_indices = @transform_0, window_bounds = array<i64: 1, 4, 128>}, {transform_indices = @transform_1, window_bounds = array<i64: 1, 4, 1>}, {transform_indices = @transform_2, window_bounds = array<i64: 1, 4, 1>}, {transform_indices = @transform_3, window_bounds = array<i64: 1, 4, 128>}]} {
    %c0 = arith.constant 0 : index
    %c0_0 = arith.constant 0 : index
    %c0_1 = arith.constant 0 : index
    %0 = vector.load %arg2[%c0, %c0_0, %c0_1] : memref<1x4x128xf32, #tpu.memory_space<vmem>>, vector<1x4x128xf32>
    %cst = arith.constant dense<0.000000e+00> : vector<1x4xf32>
    %1 = vector.multi_reduction <add>, %0, %cst [2] : vector<1x4x128xf32> to vector<1x4xf32>
    %2 = vector.shape_cast %1 : vector<1x4xf32> to vector<1x4x1xf32>
    %cst_2 = arith.constant 1.280000e+02 : f32
    %3 = vector.broadcast %cst_2 : f32 to vector<1x4x1xf32>
    %4 = arith.divf %2, %3 : vector<1x4x1xf32>
    %5 = vector.broadcast %4 : vector<1x4x1xf32> to vector<1x4x128xf32>
    %6 = arith.subf %0, %5 : vector<1x4x128xf32>
    %7 = arith.mulf %6, %6 : vector<1x4x128xf32>
    %cst_3 = arith.constant dense<0.000000e+00> : vector<1x4xf32>
    %8 = vector.multi_reduction <add>, %7, %cst_3 [2] : vector<1x4x128xf32> to vector<1x4xf32>
    %9 = vector.shape_cast %8 : vector<1x4xf32> to vector<1x4x1xf32>
    %cst_4 = arith.constant 1.280000e+02 : f32
    %10 = vector.broadcast %cst_4 : f32 to vector<1x4x1xf32>
    %11 = arith.divf %9, %10 : vector<1x4x1xf32>
    %cst_5 = arith.constant 9.99999997E-7 : f32
    %12 = vector.broadcast %cst_5 : f32 to vector<1x4x1xf32>
    %13 = arith.addf %11, %12 : vector<1x4x1xf32>
    %14 = math.rsqrt %13 : vector<1x4x1xf32>
    %c0_6 = arith.constant 0 : index
    %c0_7 = arith.constant 0 : index
    %c0_8 = arith.constant 0 : index
    %15 = vector.load %arg3[%c0_6, %c0_7, %c0_8] : memref<1x4x1xf32, #tpu.memory_space<vmem>>, vector<1x4x1xf32>
    %16 = arith.mulf %14, %15 : vector<1x4x1xf32>
    %17 = vector.broadcast %16 : vector<1x4x1xf32> to vector<1x4x128xf32>
    %18 = arith.mulf %6, %17 : vector<1x4x128xf32>
    %c0_9 = arith.constant 0 : index
    %c0_10 = arith.constant 0 : index
    %c0_11 = arith.constant 0 : index
    %19 = vector.load %arg4[%c0_9, %c0_10, %c0_11] : memref<1x4x1xf32, #tpu.memory_space<vmem>>, vector<1x4x1xf32>
    %20 = vector.broadcast %19 : vector<1x4x1xf32> to vector<1x4x128xf32>
    %21 = arith.addf %18, %20 : vector<1x4x128xf32>
    %c0_12 = arith.constant 0 : index
    %c0_13 = arith.constant 0 : index
    %c0_14 = arith.constant 0 : index
    %22 = vector.load %arg5[%c0_12, %c0_13, %c0_14] : memref<1x4x128xf32, #tpu.memory_space<vmem>>, vector<1x4x128xf32>
    tpu.vector_store %arg5[%c0_12, %c0_13, %c0_14], %21 {strides = array<i32>} : memref<1x4x128xf32, #tpu.memory_space<vmem>>, vector<1x4x128xf32>,
    return
  }
  func.func @transform_0(%arg0: i32, %arg1: i32) -> (i32, i32, i32) {
    %c0_i32 = arith.constant 0 : i32
    %c0_i32_0 = arith.constant 0 : i32
    return %arg1, %arg0, %c0_i32 : i32, i32, i32
  }
  func.func @transform_1(%arg0: i32, %arg1: i32) -> (i32, i32, i32) {
    %c0_i32 = arith.constant 0 : i32
    %c0_i32_0 = arith.constant 0 : i32
    %c0_i32_1 = arith.constant 0 : i32
    return %c0_i32, %arg0, %c0_i32_0 : i32, i32, i32
  }
  func.func @transform_2(%arg0: i32, %arg1: i32) -> (i32, i32, i32) {
    %c0_i32 = arith.constant 0 : i32
    %c0_i32_0 = arith.constant 0 : i32
    %c0_i32_1 = arith.constant 0 : i32
    return %c0_i32, %arg0, %c0_i32_0 : i32, i32, i32
  }
  func.func @transform_3(%arg0: i32, %arg1: i32) -> (i32, i32, i32) {
    %c0_i32 = arith.constant 0 : i32
    %c0_i32_0 = arith.constant 0 : i32
    return %arg1, %arg0, %c0_i32 : i32, i32, i32
  }
}

</mosaic_0001>

<llo_original>
// kernel: tpu_custom_call.1
$region0: #{tpu_custom_call.1}
  #allocation0 [shape = 'u32[]', space=smem, size = 0x4, offset = 0x4, fixed_abs, tag = 'smem constant byte address 0x4 - core index']
  #allocation1 [shape = 'u32[72,128]{1,0:T(1,128)}', space=vmem, size = 0x9000, scoped, tag = 'internal scratch']
  %s0 = inlined_call_operand.vmem [shape: f32[2,4,128], index: 0, kind: input, shape index: {}]
  %s1 = inlined_call_operand.vmem [shape: f32[1,4,1], index: 1, kind: input, shape index: {}]
  %s2 = inlined_call_operand.vmem [shape: f32[1,4,1], index: 2, kind: input, shape index: {}]
  %s3 = inlined_call_operand.hbm [shape: f32[2,4,128], index: 3, kind: output, shape index: {}]
  %s4 = sld [smem:[#allocation0]]
  $region45: #{tpu_custom_call.1} parent=0
    _
  %s6 = ssub.s32 1, %s4
  %s7 = scalar_select 0, %s6, %s4
  $region1: #{tpu_custom_call.1} parent=0
    #allocation2 [shape = 'u8[4096]{0}', space=vmem, size = 0x1000, scoped, tag = 'output window, operand 0']
    #allocation3 [shape = 's32[2]{0}', space=sflag, size = 0x8, scoped, tag = 'scoped memory for tpu_custom_call.1']
    %8 = vsyncpa [#allocation3], 0
    %s9 = scalar_lea.sflag [#allocation3], 1
    %10 = vsyncpa %s9, 0
    loop: start=0, step=1, limit=4
    $region2: #{tpu_custom_call.1} parent=1 // loop_pre_header
      _
    $region3: #{tpu_custom_call.1} parent=1 // loop_header
      %s12 = sphi 0, %s16
      %p13 = scmp.ge.s32.totalorder %s12, 4
      %s19 = sphi 0, %s31
      %s20 = sphi 0, %s27
      %s21 = sphi 0, %s19
      %s22 = sphi 0, %s20
      %s23 = sphi 0, %s21
      %s24 = sphi 0, %s22
      %s36 = sphi 0, %s38
      %s39 = sphi 0, %s36
      %s40 = sphi 0, %s39
      %s56 = sphi 0, %s40
      %s62 = sphi 0, %s64
      %s65 = sphi 0, %s62
      %s66 = sphi 0, %s65
      %s82 = sphi 0, %s66
      %s88 = sphi 0, %s90
      %s91 = sphi 0, %s88
      %s92 = sphi 0, %s91
      %s108 = sphi 0, %s92
      %s116 = sphi 0, %s118
      %s119 = sphi 0, %s116
      %s120 = sphi 0, %s119
      %s136 = sphi 0, %s120
    $region4: #{tpu_custom_call.1} parent=1 // loop_header_branch
      %15 = sbr.rel (%p13) target = $region8
    $region5: #{tpu_custom_call.1} parent=1 // loop_body
      %s17 = ssub.s32 %s12, 1
      %s18 = ssub.s32 %s12, 2
      %s25 = sadd.s32 1, %s20
      %p26 = scmp.ge.s32.totalorder %s25, 2
      %s27 = scalar_select %p26, 0, %s25
      %s28 = sadd.s32 1, %s19
      %s29 = scalar_select %p26, %s28, %s19
      %p30 = scmp.ge.s32.totalorder %s29, 1
      %s31 = scalar_select %p30, 0, %s29
      %s32 = ssub.s32 %s20, %s27
      %s33 = ssub.s32 %s19, %s31
      %s34 = sor.u32 %s32, %s33
      %p35 = scmp.eq.s32.totalorder %s34, 0
      %s37 = sadd.s32 %s36, 1
      %s38 = scalar_select %p35, %s36, %s37
      %p41 = pneg %p35
      %p42 = scmp.eq.s32.totalorder %s12, 1
      %p43 = por %p41, %p42
      %p44 = scmp.ne.s32.totalorder %s36, %s39
      %p45 = scmp.eq.s32.totalorder %s12, 0
      %p46 = por %p44, %p45
      %p47 = scmp.ne.s32.totalorder %s36, %s39
      %p48 = scmp.eq.s32.totalorder %s17, 1
      %p49 = por %p47, %p48
      %p50 = scmp.ne.s32.totalorder %s39, %s40
      %p51 = scmp.eq.s32.totalorder %s17, 0
      %p52 = por %p50, %p51
      %p53 = scmp.ne.s32.totalorder %s39, %s40
      %p54 = scmp.eq.s32.totalorder %s18, 1
      %p55 = por %p53, %p54
      %p57 = scmp.ne.s32.totalorder %s40, %s56
      %p58 = scmp.eq.s32.totalorder %s18, 0
      %p59 = por %p57, %p58
      %s60 = ssub.s32 %s19, %s31
      %p61 = scmp.eq.s32.totalorder %s60, 0
      %s63 = sadd.s32 %s62, 1
      %s64 = scalar_select %p61, %s62, %s63
      %p67 = pneg %p61
      %p68 = scmp.eq.s32.totalorder %s12, 1
      %p69 = por %p67, %p68
      %p70 = scmp.ne.s32.totalorder %s62, %s65
      %p71 = scmp.eq.s32.totalorder %s12, 0
      %p72 = por %p70, %p71
      %p73 = scmp.ne.s32.totalorder %s62, %s65
      %p74 = scmp.eq.s32.totalorder %s17, 1
      %p75 = por %p73, %p74
      %p76 = scmp.ne.s32.totalorder %s65, %s66
      %p77 = scmp.eq.s32.totalorder %s17, 0
      %p78 = por %p76, %p77
      %p79 = scmp.ne.s32.totalorder %s65, %s66
      %p80 = scmp.eq.s32.totalorder %s18, 1
      %p81 = por %p79, %p80
      %p83 = scmp.ne.s32.totalorder %s66, %s82
      %p84 = scmp.eq.s32.totalorder %s18, 0
      %p85 = por %p83, %p84
      %s86 = ssub.s32 %s19, %s31
      %p87 = scmp.eq.s32.totalorder %s86, 0
      %s89 = sadd.s32 %s88, 1
      %s90 = scalar_select %p87, %s88, %s89
      %p93 = pneg %p87
      %p94 = scmp.eq.s32.totalorder %s12, 1
      %p95 = por %p93, %p94
      %p96 = scmp.ne.s32.totalorder %s88, %s91
      %p97 = scmp.eq.s32.totalorder %s12, 0
      %p98 = por %p96, %p97
      %p99 = scmp.ne.s32.totalorder %s88, %s91
      %p100 = scmp.eq.s32.totalorder %s17, 1
      %p101 = por %p99, %p100
      %p102 = scmp.ne.s32.totalorder %s91, %s92
      %p103 = scmp.eq.s32.totalorder %s17, 0
      %p104 = por %p102, %p103
      %p105 = scmp.ne.s32.totalorder %s91, %s92
      %p106 = scmp.eq.s32.totalorder %s18, 1
      %p107 = por %p105, %p106
      %p109 = scmp.ne.s32.totalorder %s92, %s108
      %p110 = scmp.eq.s32.totalorder %s18, 0
      %p111 = por %p109, %p110
      %s112 = ssub.s32 %s20, %s27
      %s113 = ssub.s32 %s19, %s31
      %s114 = sor.u32 %s112, %s113
      %p115 = scmp.eq.s32.totalorder %s114, 0
      %s117 = sadd.s32 %s116, 1
      %s118 = scalar_select %p115, %s116, %s117
      %p121 = pneg %p115
      %p122 = scmp.eq.s32.totalorder %s12, 1
      %p123 = por %p121, %p122
      %p124 = scmp.ne.s32.totalorder %s116, %s119
      %p125 = scmp.eq.s32.totalorder %s12, 0
      %p126 = por %p124, %p125
      %p127 = scmp.ne.s32.totalorder %s116, %s119
      %p128 = scmp.eq.s32.totalorder %s17, 1
      %p129 = por %p127, %p128
      %p130 = scmp.ne.s32.totalorder %s119, %s120
      %p131 = scmp.eq.s32.totalorder %s17, 0
      %p132 = por %p130, %p131
      %p133 = scmp.ne.s32.totalorder %s119, %s120
      %p134 = scmp.eq.s32.totalorder %s18, 1
      %p135 = por %p133, %p134
      %p137 = scmp.ne.s32.totalorder %s120, %s136
      %p138 = scmp.eq.s32.totalorder %s18, 0
      %p139 = por %p137, %p138
      %p140 = scmp.le.s32.totalorder 1, %s12
      %p141 = scmp.lt.s32.totalorder %s12, 3
      %p142 = pnand %p140, %p141
      %p143 = pneg %p142
      // Predicated region
      $region9: #{tpu_custom_call.1} parent=5 // pred_check
        _
      $region10: #{tpu_custom_call.1} parent=5 // pred_check_branch
        %145 = sbr.rel (%p142) target = $region12
      $region11: #{tpu_custom_call.1} parent=5 // pred_region
        %s146 = ssub.s32 %s12, 1
        // Predicated region
        $region13: #{tpu_custom_call.1} parent=11 // pred_check
          %p147 = pneg %p78
        $region14: #{tpu_custom_call.1} parent=11 // pred_check_branch
          %149 = sbr.rel (%p147) target = $region16
        $region15: #{tpu_custom_call.1} parent=11 // pred_region
          %p150 = scmp.lt.s32.totalorder %s21, 0
          %s151 = scalar_select %p150, %s21, 0
          %s152 = smul.addr %s151, 4
          %s153 = scalar_lea.vmem %s1, %s152
        $region16: #{tpu_custom_call.1} parent=11 // pred_fallthru
          _
        // Predicated region
        $region17: #{tpu_custom_call.1} parent=11 // pred_check
          %p154 = pneg %p104
        $region18: #{tpu_custom_call.1} parent=11 // pred_check_branch
          %156 = sbr.rel (%p154) target = $region20
        $region19: #{tpu_custom_call.1} parent=11 // pred_region
          %p157 = scmp.lt.s32.totalorder %s21, 0
          %s158 = scalar_select %p157, %s21, 0
          %s159 = smul.addr %s158, 4
          %s160 = scalar_lea.vmem %s2, %s159
        $region20: #{tpu_custom_call.1} parent=11 // pred_fallthru
          _
      $region12: #{tpu_custom_call.1} parent=5 // pred_fallthru
        _
      %p161 = scmp.lt.s32.totalorder %s12, 2
      // Predicated region
      $region21: #{tpu_custom_call.1} parent=5 // pred_check
        %p162 = pneg %p161
      $region22: #{tpu_custom_call.1} parent=5 // pred_check_branch
        %164 = sbr.rel (%p162) target = $region24
      $region23: #{tpu_custom_call.1} parent=5 // pred_region
        // Predicated region
        $region25: #{tpu_custom_call.1} parent=23 // pred_check
          %p165 = pneg %p46
        $region26: #{tpu_custom_call.1} parent=23 // pred_check_branch
          %167 = sbr.rel (%p165) target = $region28
        $region27: #{tpu_custom_call.1} parent=23 // pred_region
          %p168 = scmp.lt.s32.totalorder %s20, 1
          %s169 = scalar_select %p168, %s20, 1
          %p170 = scmp.lt.s32.totalorder %s19, 0
          %s171 = scalar_select %p170, %s19, 0
          %s172 = sadd.s32 %s171, %s169
          %s173 = smul.addr %s172, 4
          %s174 = scalar_lea.vmem %s0, %s173
        $region28: #{tpu_custom_call.1} parent=23 // pred_fallthru
          _
      $region24: #{tpu_custom_call.1} parent=5 // pred_fallthru
        _
      %p175 = scmp.le.s32.totalorder 1, %s12
      %p176 = scmp.lt.s32.totalorder %s12, 3
      %p177 = pnand %p175, %p176
      %p178 = pneg %p177
      // Predicated region
      $region29: #{tpu_custom_call.1} parent=5 // pred_check
        _
      $region30: #{tpu_custom_call.1} parent=5 // pred_check_branch
        %180 = sbr.rel (%p177) target = $region32
      $region31: #{tpu_custom_call.1} parent=5 // pred_region
        %s181 = ssub.s32 %s12, 1
        %p182 = scmp.lt.s32.totalorder %s22, 1
        %s183 = scalar_select %p182, %s22, 1
        %p184 = scmp.lt.s32.totalorder %s21, 0
        %s185 = scalar_select %p184, %s21, 0
        %s186 = sadd.s32 %s185, %s183
        %s187 = smul.addr %s186, 4
        %s188 = scalar_lea.vmem %s0, %s187
        %p189 = pneg %p52
        %p190 = pneg %p49
        %p191 = scmp.lt.s32.totalorder %s21, 0
        %s192 = scalar_select %p191, %s21, 0
        %s193 = smul.addr %s192, 4
        %s194 = scalar_lea.vmem %s1, %s193
        %p195 = pneg %p78
        %p196 = pneg %p75
        %p197 = scmp.lt.s32.totalorder %s21, 0
        %s198 = scalar_select %p197, %s21, 0
        %s199 = smul.addr %s198, 4
        %s200 = scalar_lea.vmem %s2, %s199
        %p201 = pneg %p104
        %p202 = pneg %p101
        %p203 = pneg %p132
        %p204 = pneg %p129
        %s205 = sand.u32 %s119, 1
        %s206 = scalar_lea.sflag [#allocation3], %s205
        %s207 = sand.u32 %s119, 1
        %s208 = smul.addr %s207, 4
        %s209 = scalar_lea.vmem [#allocation2], %s208
        %p210 = scmp.lt.s32.totalorder %s22, 1
        %s211 = scalar_select %p210, %s22, 1
        %p212 = scmp.lt.s32.totalorder %s21, 0
        %s213 = scalar_select %p212, %s21, 0
        %s214 = sadd.s32 %s213, %s211
        %s215 = smul.addr %s214, 4
        %s216 = scalar_lea.vmem %s0, %s215
        %p217 = scmp.lt.s32.totalorder %s21, 0
        %s218 = scalar_select %p217, %s21, 0
        %s219 = smul.addr %s218, 4
        %s220 = scalar_lea.vmem %s1, %s219
        %p221 = scmp.lt.s32.totalorder %s21, 0
        %s222 = scalar_select %p221, %s21, 0
        %s223 = smul.addr %s222, 4
        %s224 = scalar_lea.vmem %s2, %s223
        %v225 = vld [vmem:[%s216] sm:$0xf]
        %vm226 = vcmask 1043456
        %v227 = vsel %vm226, %v225, 0.0
        %228 = vadd.xlane.f32.xlu0 %v227
        %v229 = vpop.xlane.xlu0 %228
        %v230 = vrcp.pop 128.0
        %v231 = vmul.f32 128.0, %v230
        %v232 = vsub.f32 1.0, %v231
        %v233 = vmul.f32 %v230, %v232
        %v234 = vadd.f32 %v230, %v233
        %vm235 = vweird.f32 %v230
        %v236 = vsel %vm235, %v230, %v234
        %v237 = vmul.f32 %v229, %v236
        %v238 = vsub.f32 %v225, %v237
        %v239 = vmul.f32 %v238, %v238
        %v240 = vsel %vm226, %v239, 0.0
        %241 = vadd.xlane.f32.xlu0 %v240
        %v242 = vpop.xlane.xlu0 %241
        %v243 = vmul.f32 %v242, %v236
        %v244 = vadd.f32 %v243, 1e-06
        %v245 = vrsqrt.pop %v244
        %v246 = vmul.f32 %v245, %v244
        %v247 = vmul.f32 %v246, %v245
        %v248 = vmul.f32 0.5, %v247
        %v249 = vsub.f32 1.5, %v248
        %v250 = vmul.f32 %v245, %v249
        %vm251 = vweird.f32 %v244
        %vm252 = vweird.f32 %v245
        %vm253 = vmor %vm251, %vm252
        %v254 = vsel %vm253, %v245, %v250
        %v255 = vld [vmem:[%s220] sm:$0xf]
        %v256 = vmul.f32 %v254, %v255
        %258 = vset.pattern.permute.xlu0 0
        %259 = vperm.xlu0 %258, %v256
        %v260 = vpop.permute.xlu0 %259
        %v262 = vmul.f32 %v238, %v260
        %v263 = vld [vmem:[%s224] sm:$0xf]
        %265 = vset.pattern.permute.xlu0 0
        %266 = vperm.xlu0 %265, %v263
        %v267 = vpop.permute.xlu0 %266
        %v269 = vadd.f32 %v262, %v267
        %270 = vst [vmem:[%s209] sm:$0xf] %v269
        %s271 = sand.u32 %s119, 1
        %s272 = scalar_lea.sflag [#allocation3], %s271
        %s273 = sand.u32 %s119, 1
        %s274 = smul.addr %s273, 4
        %s275 = scalar_lea.vmem [#allocation2], %s274
        // Predicated region
        $region33: #{tpu_custom_call.1} parent=31 // pred_check
          %p276 = pneg %p129
        $region34: #{tpu_custom_call.1} parent=31 // pred_check_branch
          %278 = sbr.rel (%p276) target = $region36
        $region35: #{tpu_custom_call.1} parent=31 // pred_region
          %280 = vsyncadd %s272, 0
          %s281 = sadd.s32 %s21, %s22
          %s282 = smul.addr %s281, 4
          %s283 = scalar_lea.hbm %s3, %s282
          %s285 = sshll.u32 %s275, 4
          %s286 = int_to_ptr.vmem [resolvable:$true] %s285
          %s287 = sshll.u32 %s283, 4
          %s288 = int_to_ptr.hbm [resolvable:$true] %s287
          %290 = dma.vmem_to_hbm [thread:$0]  %s286, 64, %s288, %s272
        $region36: #{tpu_custom_call.1} parent=31 // pred_fallthru
          _
      $region32: #{tpu_custom_call.1} parent=5 // pred_fallthru
        _
      %p291 = scmp.le.s32.totalorder 2, %s12
      // Predicated region
      $region37: #{tpu_custom_call.1} parent=5 // pred_check
        %p292 = pneg %p291
      $region38: #{tpu_custom_call.1} parent=5 // pred_check_branch
        %294 = sbr.rel (%p292) target = $region40
      $region39: #{tpu_custom_call.1} parent=5 // pred_region
        %s295 = ssub.s32 %s12, 2
        // Predicated region
        $region41: #{tpu_custom_call.1} parent=39 // pred_check
          %p296 = pneg %p135
        $region42: #{tpu_custom_call.1} parent=39 // pred_check_branch
          %298 = sbr.rel (%p296) target = $region44
        $region43: #{tpu_custom_call.1} parent=39 // pred_region
          %s299 = sand.u32 %s120, 1
          %s300 = scalar_lea.sflag [#allocation3], %s299
          %s301 = sand.u32 %s120, 1
          %s302 = smul.addr %s301, 4
          %s303 = scalar_lea.vmem [#allocation2], %s302
          %305 = dma.done %s300, 64
        $region44: #{tpu_custom_call.1} parent=39 // pred_fallthru
          _
      $region40: #{tpu_custom_call.1} parent=5 // pred_fallthru
        _
    $region6: #{tpu_custom_call.1} parent=1 // loop_footer
      %s16 = sadd.s32 1, %s12
    $region7: #{tpu_custom_call.1} parent=1 // loop_footer_branch
      %11 = sbr.rel target = $region3
    $region8: #{tpu_custom_call.1} parent=1 // loop_exit
      _
    %306 = vsyncpa [#allocation3], 1
    %s307 = scalar_lea.sflag [#allocation3], 1
    %308 = vsyncpa %s307, 1

</llo_original>
